<compile_context>
chip_gen: v5e
topology: v5e:2x2
jax: 0.10.0
libtpu: 0.0.40
codegen_flags: <defaults>
</compile_context>

<pallas_src>
import functools

import numpy as np
import jax
import jax.numpy as jnp
from jax import lax
from jax.experimental import pallas as pl
from jax.experimental.pallas import tpu as pltpu


# Feature-row layout of the packed, transposed slab (features x cells):
#   rows  0:5   pred box0  (x, y, w, h, conf)
#   rows  5:10  pred box1  (x, y, w, h, conf)
#   rows 10:30  predicted class scores  (20)
#   rows 30:50  target class scores     (20)
#   rows 50:54  target box (x, y, w, h)
#   row  54     has-object mask (1.0 / 0.0)
#   row  55     zero padding
_N_FEAT = 56


def _yolo_loss_kernel(sel_ref, slab_ref, out_ref,
                      acc_cls, acc_reg, acc_conf, acc_no,
                      *, l_coord, l_noobj, chunk, n_chunks):
    i = pl.program_id(0)

    @pl.when(i == 0)
    def _init():
        acc_cls[...] = jnp.zeros_like(acc_cls)
        acc_reg[...] = jnp.zeros_like(acc_reg)
        acc_conf[...] = jnp.zeros_like(acc_conf)
        acc_no[...] = jnp.zeros_like(acc_no)

    # Global best-box decision (reference bug: one decision from the LAST object
    # cell), precomputed in the wrapper.  Broadcast once per grid step.
    sel_mask = jnp.full((1, chunk), sel_ref[0], jnp.float32) > 0.5   # True -> box0
    biou_vec = jnp.full((1, chunk), sel_ref[1], jnp.float32)

    def body(c, carry):
        c_cls, c_reg, c_conf, c_no = carry
        l0 = pl.multiple_of(c * chunk, chunk)
        cols = pl.ds(l0, chunk)

        m = slab_ref[54:55, cols]                       # (1, chunk)
        obj = m > 0.0

        # class loss: unmasked SSE over all cells (reference uses plain mse-sum).
        dcls = slab_ref[10:30, cols] - slab_ref[30:50, cols]
        c_cls = c_cls + dcls * dcls

        # no-object loss: the module uses box0's confidence for BOTH terms.
        c0 = slab_ref[4:5, cols]
        c_no = c_no + jnp.where(obj, 0.0, c0 * c0)

        # globally-selected "best" box (same box index for every cell).
        pb = jnp.where(sel_mask, slab_ref[0:5, cols], slab_ref[5:10, cols])

        xy_d = pb[0:2, :] - slab_ref[50:52, cols]
        wh_d = (jnp.sqrt(jnp.where(obj, pb[2:4, :], 0.0))
                - jnp.sqrt(jnp.where(obj, slab_ref[52:54, cols], 0.0)))
        c_reg = c_reg + jnp.where(obj, xy_d * xy_d + wh_d * wh_d, 0.0)

        dconf = pb[4:5, :] - biou_vec
        c_conf = c_conf + jnp.where(obj, dconf * dconf, 0.0)
        return c_cls, c_reg, c_conf, c_no

    zeros = lambda r: jnp.zeros((r, chunk), jnp.float32)
    c_cls, c_reg, c_conf, c_no = lax.fori_loop(
        0, n_chunks, body, (zeros(20), zeros(2), zeros(1), zeros(1)), unroll=True)

    # One read-modify-write of the persistent accumulators per grid step.
    acc_cls[...] += c_cls
    acc_reg[...] += c_reg
    acc_conf[...] += c_conf
    acc_no[...] += c_no

    @pl.when(i == pl.num_programs(0) - 1)
    def _finalize():
        cls_loss = jnp.sum(acc_cls[...])
        reg_loss = l_coord * jnp.sum(acc_reg[...])
        conf_loss = jnp.sum(acc_conf[...])
        noobj_loss = l_noobj * 2.0 * jnp.sum(acc_no[...])
        total = cls_loss + noobj_loss + reg_loss + conf_loss

        lane = lax.broadcasted_iota(jnp.int32, (8, 128), 1)
        out_ref[...] = (jnp.where(lane == 0, total, 0.0)
                        + jnp.where(lane == 1, reg_loss, 0.0)
                        + jnp.where(lane == 2, conf_loss, 0.0)
                        + jnp.where(lane == 3, noobj_loss, 0.0)
                        + jnp.where(lane == 4, cls_loss, 0.0))


def _last_cell_selection(pred_flat, tbox_flat, mask1d, S):
    """Replicates the reference's buggy global box selection (last object row)."""
    cells = mask1d.shape[0]
    idx = jnp.arange(cells, dtype=jnp.int32)
    last_idx = jnp.max(jnp.where(mask1d, idx, -1))
    any_obj = last_idx >= 0
    safe_idx = jnp.maximum(last_idx, 0)
    last_pred = lax.dynamic_slice_in_dim(pred_flat, safe_idx, 1, axis=0)[0]   # (30,)
    last_tbox = lax.dynamic_slice_in_dim(tbox_flat, safe_idx, 1, axis=0)[0]   # (4,)

    def xyxy(b):
        xy = b[0:2] / S
        wh = b[2:4]
        return xy - 0.5 * wh, xy + 0.5 * wh

    def iou(amin, amax, bmin, bmax):
        lt = jnp.maximum(amin, bmin)
        rb = jnp.minimum(amax, bmax)
        wh = jnp.maximum(rb - lt, 0.0)
        inter = wh[0] * wh[1]
        a1 = (amax[0] - amin[0]) * (amax[1] - amin[1])
        a2 = (bmax[0] - bmin[0]) * (bmax[1] - bmin[1])
        return inter / (a1 + a2 - inter)

    b0min, b0max = xyxy(last_pred[0:4])
    b1min, b1max = xyxy(last_pred[5:9])
    tmin, tmax = xyxy(last_tbox)
    iou1 = iou(b0min, b0max, tmin, tmax)
    iou2 = iou(b1min, b1max, tmin, tmax)
    sel = jnp.where(iou1 > iou2, 1.0, 0.0)         # 1.0 -> box0 (NaN>NaN -> box1, as torch)
    best_iou = jnp.where(iou1 > iou2, iou1, iou2)
    best_iou = jnp.where(any_obj, best_iou, 0.0)   # guard 0/0 when there is no object cell
    return jnp.stack([sel, best_iou]).astype(jnp.float32)   # (2,)


def yolo_loss(pred_tensor, target_boxes, target_cls, has_object_map,
              *, S, B, l_coord, l_noobj, max_tile=2048, chunk=256):
    """Pallas implementation of YoloLoss(S, B, l_coord, l_noobj).forward."""
    assert B == 2, "module hard-codes two boxes per cell"
    assert chunk % 128 == 0 and max_tile % chunk == 0
    N = pred_tensor.shape[0]
    cells = N * S * S
    f32 = jnp.float32

    pred_flat = pred_tensor.reshape(cells, 5 * B + 20).astype(f32)
    tcls_flat = target_cls.reshape(cells, 20).astype(f32)
    tbox_flat = target_boxes.reshape(cells, 4).astype(f32)
    m_flat = has_object_map.reshape(cells, 1).astype(f32)

    # O(1) one-row computation (see reference bug); two f32 scalars for SMEM.
    selinfo = _last_cell_selection(pred_flat, tbox_flat,
                                   has_object_map.reshape(cells), float(S))

    # --- tiling: lane axis = cells, padded to a multiple of the tile ---
    tile = min(max_tile, pl.cdiv(cells, chunk) * chunk)
    cells_pad = pl.cdiv(cells, tile) * tile
    num_tiles = cells_pad // tile
    n_chunks = tile // chunk
    pad = cells_pad - cells

    # Packed feature-major slab (56, cells_pad); padded cells are all-zero (mask 0).
    feat = jnp.concatenate([pred_flat, tcls_flat, tbox_flat, m_flat], axis=1)   # (cells, 55)
    feat = jnp.pad(feat, ((0, pad), (0, _N_FEAT - feat.shape[1])))              # (cells_pad, 56)
    slab = feat.T                                                               # (56, cells_pad)

    kernel = functools.partial(_yolo_loss_kernel,
                               l_coord=float(l_coord), l_noobj=float(l_noobj),
                               chunk=chunk, n_chunks=n_chunks)

    out = pl.pallas_call(
        kernel,
        out_shape=jax.ShapeDtypeStruct((8, 128), jnp.float32),
        grid_spec=pltpu.PrefetchScalarGridSpec(
            num_scalar_prefetch=0,
            grid=(num_tiles,),
            in_specs=[pl.BlockSpec(memory_space=pltpu.MemorySpace.SMEM),   # (2,) scalars
                      pl.BlockSpec((_N_FEAT, tile), lambda i: (0, i))],
            out_specs=pl.BlockSpec((8, 128), lambda i: (0, 0)),
            scratch_shapes=[pltpu.VMEM((20, chunk), jnp.float32),
                            pltpu.VMEM((2, chunk), jnp.float32),
                            pltpu.VMEM((1, chunk), jnp.float32),
                            pltpu.VMEM((1, chunk), jnp.float32)]),
        compiler_params=pltpu.CompilerParams(
            dimension_semantics=("arbitrary",)),   # cross-step accumulators -> sequential
    )(selinfo, slab)
    # TODO(synk): optional v7x 2-TensorCore split (leading parallel grid axis with
    # per-core partial accumulators combined in the wrapper) not implemented.

    n = float(N)
    return dict(total_loss=out[0, 0] / n, reg_loss=out[0, 1] / n,
                containing_obj_loss=out[0, 2] / n, no_obj_loss=out[0, 3] / n,
                cls_loss=out[0, 4] / n)


def yolo_loss_reference(pred, tboxes, tcls, hmap, *, S, l_coord, l_noobj):
    """Pure numpy re-implementation of the PyTorch module's forward (bugs included)."""
    pred = np.asarray(pred, np.float32)
    tboxes = np.asarray(tboxes, np.float32)
    tcls = np.asarray(tcls, np.float32)
    hmap = np.asarray(hmap)
    N = pred.shape[0]

    cls_loss = np.sum((pred[..., 10:] - tcls) ** 2)
    no_obj = l_noobj * 2.0 * np.sum((~hmap) * pred[..., 4] ** 2)

    m = hmap.reshape(-1)
    pb0 = pred[..., 0:5].reshape(-1, 5)[m]
    pb1 = pred[..., 5:10].reshape(-1, 5)[m]
    tb = tboxes.reshape(-1, 4)[m]

    def xyxy_last(b):  # replicates buggy xywh2xyxy (every row becomes the last row)
        x, y, w, h = b[-1]
        return np.array([x / S - 0.5 * w, y / S - 0.5 * h,
                         x / S + 0.5 * w, y / S + 0.5 * h], np.float32)

    def iou(a, b):
        lt = np.maximum(a[:2], b[:2])
        rb = np.minimum(a[2:], b[2:])
        wh = np.clip(rb - lt, 0.0, None)
        inter = wh[0] * wh[1]
        a1 = (a[2] - a[0]) * (a[3] - a[1])
        a2 = (b[2] - b[0]) * (b[3] - b[1])
        return inter / (a1 + a2 - inter)

    t_last = xyxy_last(tb)
    iou1 = iou(xyxy_last(pb0[:, :4]), t_last)
    iou2 = iou(xyxy_last(pb1[:, :4]), t_last)
    sel = iou1 > iou2
    best_iou = iou1 if sel else iou2
    best = pb0 if sel else pb1
    reg = l_coord * (np.sum((best[:, :2] - tb[:, :2]) ** 2)
                     + np.sum((np.sqrt(best[:, 2:4]) - np.sqrt(tb[:, 2:4])) ** 2))
    conf = np.sum((best[:, 4] - best_iou) ** 2)
    total = cls_loss + no_obj + reg + conf
    return dict(total_loss=total / N, reg_loss=reg / N,
                containing_obj_loss=conf / N, no_obj_loss=no_obj / N,
                cls_loss=cls_loss / N)


if __name__ == "__main__":
    S, B = 7, 2
    l_coord, l_noobj = 5.0, 0.5

    def make_inputs(batch, key):
        k1, k2, k3, k4 = jax.random.split(key, 4)
        pred = jax.random.uniform(k1, (batch, S, S, B * 5 + 20), jnp.float32,
                                  minval=0.05, maxval=0.95)
        tboxes = jax.random.uniform(k2, (batch, S, S, 4), jnp.float32,
                                    minval=0.05, maxval=0.95)
        tcls = jax.random.uniform(k3, (batch, S, S, 20), jnp.float32)
        hmap = jax.random.uniform(k4, (batch, S, S)) < 0.3
        hmap = hmap.at[0, 3, 3].set(True)   # guarantee at least one object cell
        return pred, tboxes, tcls, hmap

    # Case 1: default small problem -> single grid step, single chunk.
    pred, tboxes, tcls, hmap = make_inputs(2, jax.random.PRNGKey(0))
    out = yolo_loss(pred, tboxes, tcls, hmap, S=S, B=B,
                    l_coord=l_coord, l_noobj=l_noobj)
    out = {k: jax.block_until_ready(v) for k, v in out.items()}
    ref = yolo_loss_reference(pred, tboxes, tcls, hmap, S=S,
                              l_coord=l_coord, l_noobj=l_noobj)
    for k in ref:
        np.testing.assert_allclose(float(out[k]), float(ref[k]), rtol=2e-3, atol=2e-3)

    # Case 2: exercises multiple chunks per step and multiple grid steps.
    pred2, tboxes2, tcls2, hmap2 = make_inputs(12, jax.random.PRNGKey(1))
    out2 = yolo_loss(pred2, tboxes2, tcls2, hmap2, S=S, B=B,
                     l_coord=l_coord, l_noobj=l_noobj, max_tile=256, chunk=128)
    out2 = {k: jax.block_until_ready(v) for k, v in out2.items()}
    ref2 = yolo_loss_reference(pred2, tboxes2, tcls2, hmap2, S=S,
                               l_coord=l_coord, l_noobj=l_noobj)
    for k in ref2:
        np.testing.assert_allclose(float(out2[k]), float(ref2[k]), rtol=2e-3, atol=2e-3)

    print("KERNEL_OK")
</pallas_src>

<mosaic_0001>
module attributes {stable_mosaic.version = 11 : i64} {
  func.func @_yolo_loss_kernel(%arg0: i32, %arg1: memref<2xf32, #tpu.memory_space<smem>>, %arg2: memref<56x256xf32, #tpu.memory_space<vmem>>, %arg3: memref<8x128xf32, #tpu.memory_space<vmem>>, %arg4: memref<20x256xf32, #tpu.memory_space<vmem>>, %arg5: memref<2x256xf32, #tpu.memory_space<vmem>>, %arg6: memref<1x256xf32, #tpu.memory_space<vmem>>, %arg7: memref<1x256xf32, #tpu.memory_space<vmem>>) attributes {dimension_semantics = [#tpu.dimension_semantics<arbitrary>], iteration_bounds = array<i64: 1>, scalar_prefetch = 0 : i64, scratch_operands = 4 : i64, tpu.core_type = #tpu.core_type<tc>, window_params = [{transform_indices = @transform_0, window_bounds = array<i64: 2>}, {transform_indices = @transform_1, window_bounds = array<i64: 56, 256>}, {pipeline_mode = #tpu.pipeline_mode<synchronous>, transform_indices = @transform_2, window_bounds = array<i64: 8, 128>}]} {
    %c0_i32 = arith.constant 0 : i32
    %0 = arith.cmpi eq, %arg0, %c0_i32 : i32
    %1 = arith.extui %0 : i1 to i32
    %c0_i32_0 = arith.constant 0 : i32
    %2 = arith.cmpi ne, %1, %c0_i32_0 : i32
    scf.if %2 {
      %cst_31 = arith.constant 0.000000e+00 : f32
      %86 = vector.broadcast %cst_31 : f32 to vector<20x256xf32>
      %c0_32 = arith.constant 0 : index
      %c0_33 = arith.constant 0 : index
      %87 = vector.load %arg4[%c0_32, %c0_33] : memref<20x256xf32, #tpu.memory_space<vmem>>, vector<20x256xf32>
      tpu.vector_store %arg4[%c0_32, %c0_33], %86 {strides = array<i32>} : memref<20x256xf32, #tpu.memory_space<vmem>>, vector<20x256xf32>,
      %cst_34 = arith.constant 0.000000e+00 : f32
      %88 = vector.broadcast %cst_34 : f32 to vector<2x256xf32>
      %c0_35 = arith.constant 0 : index
      %c0_36 = arith.constant 0 : index
      %89 = vector.load %arg5[%c0_35, %c0_36] : memref<2x256xf32, #tpu.memory_space<vmem>>, vector<2x256xf32>
      tpu.vector_store %arg5[%c0_35, %c0_36], %88 {strides = array<i32>} : memref<2x256xf32, #tpu.memory_space<vmem>>, vector<2x256xf32>,
      %cst_37 = arith.constant 0.000000e+00 : f32
      %90 = vector.broadcast %cst_37 : f32 to vector<1x256xf32>
      %c0_38 = arith.constant 0 : index
      %c0_39 = arith.constant 0 : index
      %91 = vector.load %arg6[%c0_38, %c0_39] : memref<1x256xf32, #tpu.memory_space<vmem>>, vector<1x256xf32>
      tpu.vector_store %arg6[%c0_38, %c0_39], %90 {strides = array<i32>} : memref<1x256xf32, #tpu.memory_space<vmem>>, vector<1x256xf32>,
      %cst_40 = arith.constant 0.000000e+00 : f32
      %92 = vector.broadcast %cst_40 : f32 to vector<1x256xf32>
      %c0_41 = arith.constant 0 : index
      %c0_42 = arith.constant 0 : index
      %93 = vector.load %arg7[%c0_41, %c0_42] : memref<1x256xf32, #tpu.memory_space<vmem>>, vector<1x256xf32>
      tpu.vector_store %arg7[%c0_41, %c0_42], %92 {strides = array<i32>} : memref<1x256xf32, #tpu.memory_space<vmem>>, vector<1x256xf32>,
    } else {
    }
    %c0 = arith.constant 0 : index
    %3 = memref.load %arg1[%c0] : memref<2xf32, #tpu.memory_space<smem>>
    %4 = vector.broadcast %3 : f32 to vector<1x256xf32>
    %cst = arith.constant 5.000000e-01 : f32
    %5 = vector.broadcast %cst : f32 to vector<1x256xf32>
    %6 = arith.cmpf ogt, %4, %5 : vector<1x256xf32>
    %c1 = arith.constant 1 : index
    %7 = memref.load %arg1[%c1] : memref<2xf32, #tpu.memory_space<smem>>
    %8 = vector.broadcast %7 : f32 to vector<1x256xf32>
    %cst_1 = arith.constant 0.000000e+00 : f32
    %9 = vector.broadcast %cst_1 : f32 to vector<20x256xf32>
    %cst_2 = arith.constant 0.000000e+00 : f32
    %10 = vector.broadcast %cst_2 : f32 to vector<2x256xf32>
    %cst_3 = arith.constant 0.000000e+00 : f32
    %11 = vector.broadcast %cst_3 : f32 to vector<1x256xf32>
    %cst_4 = arith.constant 0.000000e+00 : f32
    %12 = vector.broadcast %cst_4 : f32 to vector<1x256xf32>
    %c0_i32_5 = arith.constant 0 : i32
    %c256_i32 = arith.constant 256 : i32
    %13 = arith.muli %c0_i32_5, %c256_i32 : i32
    %14 = tpu.assume_multiple %13, 256 : i32
    %c54 = arith.constant 54 : index
    %15 = arith.index_cast %14 : i32 to index
    %16 = vector.load %arg2[%c54, %15] : memref<56x256xf32, #tpu.memory_space<vmem>>, vector<1x256xf32>
    %cst_6 = arith.constant 0.000000e+00 : f32
    %17 = vector.broadcast %cst_6 : f32 to vector<1x256xf32>
    %18 = arith.cmpf ogt, %16, %17 : vector<1x256xf32>
    %c10 = arith.constant 10 : index
    %19 = arith.index_cast %14 : i32 to index
    %20 = vector.load %arg2[%c10, %19] : memref<56x256xf32, #tpu.memory_space<vmem>>, vector<20x256xf32>
    %c30 = arith.constant 30 : index
    %21 = arith.index_cast %14 : i32 to index
    %22 = vector.load %arg2[%c30, %21] : memref<56x256xf32, #tpu.memory_space<vmem>>, vector<20x256xf32>
    %23 = arith.subf %20, %22 : vector<20x256xf32>
    %24 = arith.mulf %23, %23 : vector<20x256xf32>
    %25 = arith.addf %9, %24 : vector<20x256xf32>
    %c4 = arith.constant 4 : index
    %26 = arith.index_cast %14 : i32 to index
    %27 = vector.load %arg2[%c4, %26] : memref<56x256xf32, #tpu.memory_space<vmem>>, vector<1x256xf32>
    %28 = arith.mulf %27, %27 : vector<1x256xf32>
    %cst_7 = arith.constant 0.000000e+00 : f32
    %29 = vector.broadcast %cst_7 : f32 to vector<1x256xf32>
    %30 = arith.select %18, %29, %28 : vector<1x256xi1>, vector<1x256xf32>
    %31 = arith.addf %12, %30 : vector<1x256xf32>
    %c0_8 = arith.constant 0 : index
    %32 = arith.index_cast %14 : i32 to index
    %33 = vector.load %arg2[%c0_8, %32] : memref<56x256xf32, #tpu.memory_space<vmem>>, vector<5x256xf32>
    %c5 = arith.constant 5 : index
    %34 = arith.index_cast %14 : i32 to index
    %35 = vector.load %arg2[%c5, %34] : memref<56x256xf32, #tpu.memory_space<vmem>>, vector<5x256xf32>
    %36 = vector.shape_cast %6 : vector<1x256xi1> to vector<1x256xi1>
    %37 = vector.broadcast %36 : vector<1x256xi1> to vector<5x256xi1>
    %38 = arith.select %37, %33, %35 : vector<5x256xi1>, vector<5x256xf32>
    %39 = vector.extract_strided_slice %38 {offsets = [0, 0], sizes = [2, 256], strides = [1, 1]} : vector<5x256xf32> to vector<2x256xf32>
    %c50 = arith.constant 50 : index
    %40 = arith.index_cast %14 : i32 to index
    %41 = vector.load %arg2[%c50, %40] : memref<56x256xf32, #tpu.memory_space<vmem>>, vector<2x256xf32>
    %42 = arith.subf %39, %41 : vector<2x256xf32>
    %43 = vector.extract_strided_slice %38 {offsets = [2, 0], sizes = [2, 256], strides = [1, 1]} : vector<5x256xf32> to vector<2x256xf32>
    %cst_9 = arith.constant 0.000000e+00 : f32
    %44 = vector.shape_cast %18 : vector<1x256xi1> to vector<1x256xi1>
    %45 = vector.broadcast %44 : vector<1x256xi1> to vector<2x256xi1>
    %46 = vector.broadcast %cst_9 : f32 to vector<2x256xf32>
    %47 = arith.select %45, %43, %46 : vector<2x256xi1>, vector<2x256xf32>
    %48 = math.sqrt %47 : vector<2x256xf32>
    %c52 = arith.constant 52 : index
    %49 = arith.index_cast %14 : i32 to index
    %50 = vector.load %arg2[%c52, %49] : memref<56x256xf32, #tpu.memory_space<vmem>>, vector<2x256xf32>
    %cst_10 = arith.constant 0.000000e+00 : f32
    %51 = vector.shape_cast %18 : vector<1x256xi1> to vector<1x256xi1>
    %52 = vector.broadcast %51 : vector<1x256xi1> to vector<2x256xi1>
    %53 = vector.broadcast %cst_10 : f32 to vector<2x256xf32>
    %54 = arith.select %52, %50, %53 : vector<2x256xi1>, vector<2x256xf32>
    %55 = math.sqrt %54 : vector<2x256xf32>
    %56 = arith.subf %48, %55 : vector<2x256xf32>
    %57 = arith.mulf %42, %42 : vector<2x256xf32>
    %58 = arith.mulf %56, %56 : vector<2x256xf32>
    %59 = arith.addf %57, %58 : vector<2x256xf32>
    %cst_11 = arith.constant 0.000000e+00 : f32
    %60 = vector.shape_cast %18 : vector<1x256xi1> to vector<1x256xi1>
    %61 = vector.broadcast %60 : vector<1x256xi1> to vector<2x256xi1>
    %62 = vector.broadcast %cst_11 : f32 to vector<2x256xf32>
    %63 = arith.select %61, %59, %62 : vector<2x256xi1>, vector<2x256xf32>
    %64 = arith.addf %10, %63 : vector<2x256xf32>
    %65 = vector.extract_strided_slice %38 {offsets = [4, 0], sizes = [1, 256], strides = [1, 1]} : vector<5x256xf32> to vector<1x256xf32>
    %66 = arith.subf %65, %8 : vector<1x256xf32>
    %67 = arith.mulf %66, %66 : vector<1x256xf32>
    %cst_12 = arith.constant 0.000000e+00 : f32
    %68 = vector.broadcast %cst_12 : f32 to vector<1x256xf32>
    %69 = arith.select %18, %67, %68 : vector<1x256xi1>, vector<1x256xf32>
    %70 = arith.addf %11, %69 : vector<1x256xf32>
    %c1_i32 = arith.constant 1 : i32
    %c0_13 = arith.constant 0 : index
    %c0_14 = arith.constant 0 : index
    %71 = vector.load %arg4[%c0_13, %c0_14] : memref<20x256xf32, #tpu.memory_space<vmem>>, vector<20x256xf32>
    %72 = arith.addf %71, %25 : vector<20x256xf32>
    %c0_15 = arith.constant 0 : index
    %c0_16 = arith.constant 0 : index
    %73 = vector.load %arg4[%c0_15, %c0_16] : memref<20x256xf32, #tpu.memory_space<vmem>>, vector<20x256xf32>
    tpu.vector_store %arg4[%c0_15, %c0_16], %72 {strides = array<i32>} : memref<20x256xf32, #tpu.memory_space<vmem>>, vector<20x256xf32>,
    %c0_17 = arith.constant 0 : index
    %c0_18 = arith.constant 0 : index
    %74 = vector.load %arg5[%c0_17, %c0_18] : memref<2x256xf32, #tpu.memory_space<vmem>>, vector<2x256xf32>
    %75 = arith.addf %74, %64 : vector<2x256xf32>
    %c0_19 = arith.constant 0 : index
    %c0_20 = arith.constant 0 : index
    %76 = vector.load %arg5[%c0_19, %c0_20] : memref<2x256xf32, #tpu.memory_space<vmem>>, vector<2x256xf32>
    tpu.vector_store %arg5[%c0_19, %c0_20], %75 {strides = array<i32>} : memref<2x256xf32, #tpu.memory_space<vmem>>, vector<2x256xf32>,
    %c0_21 = arith.constant 0 : index
    %c0_22 = arith.constant 0 : index
    %77 = vector.load %arg6[%c0_21, %c0_22] : memref<1x256xf32, #tpu.memory_space<vmem>>, vector<1x256xf32>
    %78 = arith.addf %77, %70 : vector<1x256xf32>
    %c0_23 = arith.constant 0 : index
    %c0_24 = arith.constant 0 : index
    %79 = vector.load %arg6[%c0_23, %c0_24] : memref<1x256xf32, #tpu.memory_space<vmem>>, vector<1x256xf32>
    tpu.vector_store %arg6[%c0_23, %c0_24], %78 {strides = array<i32>} : memref<1x256xf32, #tpu.memory_space<vmem>>, vector<1x256xf32>,
    %c0_25 = arith.constant 0 : index
    %c0_26 = arith.constant 0 : index
    %80 = vector.load %arg7[%c0_25, %c0_26] : memref<1x256xf32, #tpu.memory_space<vmem>>, vector<1x256xf32>
    %81 = arith.addf %80, %31 : vector<1x256xf32>
    %c0_27 = arith.constant 0 : index
    %c0_28 = arith.constant 0 : index
    %82 = vector.load %arg7[%c0_27, %c0_28] : memref<1x256xf32, #tpu.memory_space<vmem>>, vector<1x256xf32>
    tpu.vector_store %arg7[%c0_27, %c0_28], %81 {strides = array<i32>} : memref<1x256xf32, #tpu.memory_space<vmem>>, vector<1x256xf32>,
    %c0_i32_29 = arith.constant 0 : i32
    %83 = arith.cmpi eq, %arg0, %c0_i32_29 : i32
    %84 = arith.extui %83 : i1 to i32
    %c0_i32_30 = arith.constant 0 : i32
    %85 = arith.cmpi ne, %84, %c0_i32_30 : i32
    scf.if %85 {
      %c0_31 = arith.constant 0 : index
      %c0_32 = arith.constant 0 : index
      %86 = vector.load %arg4[%c0_31, %c0_32] : memref<20x256xf32, #tpu.memory_space<vmem>>, vector<20x256xf32>
      %87 = vector.shape_cast %86 : vector<20x256xf32> to vector<1x20x256xf32>
      %cst_33 = arith.constant dense<0.000000e+00> : vector<1xf32>
      %88 = vector.multi_reduction <add>, %87, %cst_33 [1, 2] : vector<1x20x256xf32> to vector<1xf32>
      %89 = vector.shape_cast %88 : vector<1xf32> to vector<1x1x1xf32>
      %90 = vector.extract %89[0, 0, 0] : f32 from vector<1x1x1xf32>
      %c0_34 = arith.constant 0 : index
      %c0_35 = arith.constant 0 : index
      %91 = vector.load %arg5[%c0_34, %c0_35] : memref<2x256xf32, #tpu.memory_space<vmem>>, vector<2x256xf32>
      %92 = vector.shape_cast %91 : vector<2x256xf32> to vector<1x2x256xf32>
      %cst_36 = arith.constant dense<0.000000e+00> : vector<1xf32>
      %93 = vector.multi_reduction <add>, %92, %cst_36 [1, 2] : vector<1x2x256xf32> to vector<1xf32>
      %94 = vector.shape_cast %93 : vector<1xf32> to vector<1x1x1xf32>
      %95 = vector.extract %94[0, 0, 0] : f32 from vector<1x1x1xf32>
      %cst_37 = arith.constant 5.000000e+00 : f32
      %96 = arith.mulf %cst_37, %95 : f32
      %c0_38 = arith.constant 0 : index
      %c0_39 = arith.constant 0 : index
      %97 = vector.load %arg6[%c0_38, %c0_39] : memref<1x256xf32, #tpu.memory_space<vmem>>, vector<1x256xf32>
      %98 = vector.shape_cast %97 : vector<1x256xf32> to vector<1x1x256xf32>
      %cst_40 = arith.constant dense<0.000000e+00> : vector<1xf32>
      %99 = vector.multi_reduction <add>, %98, %cst_40 [1, 2] : vector<1x1x256xf32> to vector<1xf32>
      %100 = vector.shape_cast %99 : vector<1xf32> to vector<1x1x1xf32>
      %101 = vector.extract %100[0, 0, 0] : f32 from vector<1x1x1xf32>
      %c0_41 = arith.constant 0 : index
      %c0_42 = arith.constant 0 : index
      %102 = vector.load %arg7[%c0_41, %c0_42] : memref<1x256xf32, #tpu.memory_space<vmem>>, vector<1x256xf32>
      %103 = vector.shape_cast %102 : vector<1x256xf32> to vector<1x1x256xf32>
      %cst_43 = arith.constant dense<0.000000e+00> : vector<1xf32>
      %104 = vector.multi_reduction <add>, %103, %cst_43 [1, 2] : vector<1x1x256xf32> to vector<1xf32>
      %105 = vector.shape_cast %104 : vector<1xf32> to vector<1x1x1xf32>
      %106 = vector.extract %105[0, 0, 0] : f32 from vector<1x1x1xf32>
      %cst_44 = arith.constant 1.000000e+00 : f32
      %107 = arith.mulf %cst_44, %106 : f32
      %108 = arith.addf %90, %107 : f32
      %109 = arith.addf %108, %96 : f32
      %110 = arith.addf %109, %101 : f32
      %111 = tpu.iota {dimensions = array<i32: 1>} : vector<8x128xi32>
      %c0_i32_45 = arith.constant 0 : i32
      %112 = vector.broadcast %c0_i32_45 : i32 to vector<8x128xi32>
      %113 = arith.cmpi eq, %111, %112 : vector<8x128xi32>
      %cst_46 = arith.constant 0.000000e+00 : f32
      %114 = vector.broadcast %110 : f32 to vector<8x128xf32>
      %115 = vector.broadcast %cst_46 : f32 to vector<8x128xf32>
      %116 = arith.select %113, %114, %115 : vector<8x128xi1>, vector<8x128xf32>
      %c1_i32_47 = arith.constant 1 : i32
      %117 = vector.broadcast %c1_i32_47 : i32 to vector<8x128xi32>
      %118 = arith.cmpi eq, %111, %117 : vector<8x128xi32>
      %cst_48 = arith.constant 0.000000e+00 : f32
      %119 = vector.broadcast %96 : f32 to vector<8x128xf32>
      %120 = vector.broadcast %cst_48 : f32 to vector<8x128xf32>
      %121 = arith.select %118, %119, %120 : vector<8x128xi1>, vector<8x128xf32>
      %122 = arith.addf %116, %121 : vector<8x128xf32>
      %c2_i32 = arith.constant 2 : i32
      %123 = vector.broadcast %c2_i32 : i32 to vector<8x128xi32>
      %124 = arith.cmpi eq, %111, %123 : vector<8x128xi32>
      %cst_49 = arith.constant 0.000000e+00 : f32
      %125 = vector.broadcast %101 : f32 to vector<8x128xf32>
      %126 = vector.broadcast %cst_49 : f32 to vector<8x128xf32>
      %127 = arith.select %124, %125, %126 : vector<8x128xi1>, vector<8x128xf32>
      %128 = arith.addf %122, %127 : vector<8x128xf32>
      %c3_i32 = arith.constant 3 : i32
      %129 = vector.broadcast %c3_i32 : i32 to vector<8x128xi32>
      %130 = arith.cmpi eq, %111, %129 : vector<8x128xi32>
      %cst_50 = arith.constant 0.000000e+00 : f32
      %131 = vector.broadcast %107 : f32 to vector<8x128xf32>
      %132 = vector.broadcast %cst_50 : f32 to vector<8x128xf32>
      %133 = arith.select %130, %131, %132 : vector<8x128xi1>, vector<8x128xf32>
      %134 = arith.addf %128, %133 : vector<8x128xf32>
      %c4_i32 = arith.constant 4 : i32
      %135 = vector.broadcast %c4_i32 : i32 to vector<8x128xi32>
      %136 = arith.cmpi eq, %111, %135 : vector<8x128xi32>
      %cst_51 = arith.constant 0.000000e+00 : f32
      %137 = vector.broadcast %90 : f32 to vector<8x128xf32>
      %138 = vector.broadcast %cst_51 : f32 to vector<8x128xf32>
      %139 = arith.select %136, %137, %138 : vector<8x128xi1>, vector<8x128xf32>
      %140 = arith.addf %134, %139 : vector<8x128xf32>
      %c0_52 = arith.constant 0 : index
      %c0_53 = arith.constant 0 : index
      %141 = vector.load %arg3[%c0_52, %c0_53] : memref<8x128xf32, #tpu.memory_space<vmem>>, vector<8x128xf32>
      tpu.vector_store %arg3[%c0_52, %c0_53], %140 {strides = array<i32>} : memref<8x128xf32, #tpu.memory_space<vmem>>, vector<8x128xf32>,
    } else {
    }
    return
  }
  func.func @transform_0(%arg0: i32) -> i32 {
    %c0_i32 = arith.constant 0 : i32
    %c0_i32_0 = arith.constant 0 : i32
    return %c0_i32 : i32
  }
  func.func @transform_1(%arg0: i32) -> (i32, i32) {
    %c0_i32 = arith.constant 0 : i32
    %c0_i32_0 = arith.constant 0 : i32
    return %c0_i32, %arg0 : i32, i32
  }
  func.func @transform_2(%arg0: i32) -> (i32, i32) {
    %c0_i32 = arith.constant 0 : i32
    %c0_i32_0 = arith.constant 0 : i32
    %c0_i32_1 = arith.constant 0 : i32
    return %c0_i32, %c0_i32_0 : i32, i32
  }
}

</mosaic_0001>

<llo_original>
// kernel: tpu_custom_call.1
$region0: #{tpu_custom_call.1}
  #allocation0 [shape = 'u32[]', space=smem, size = 0x4, offset = 0x4, fixed_abs, tag = 'smem constant byte address 0x4 - core index']
  #allocation1 [shape = 'u32[72,128]{1,0:T(1,128)}', space=vmem, size = 0x9000, scoped, tag = 'internal scratch']
  #allocation2 [shape = 'f32[20,256]{1,0:T(8,128)}', space=vmem, size = 0x6000, scoped, tag = 'scratch operand']
  #allocation3 [shape = 'f32[2,256]{1,0:T(2,128)}', space=vmem, size = 0x800, scoped, tag = 'scratch operand']
  #allocation4 [shape = 'f32[1,256]{1,0:T(1,128)}', space=vmem, size = 0x400, scoped, tag = 'scratch operand']
  #allocation5 [shape = 'f32[1,256]{1,0:T(1,128)}', space=vmem, size = 0x400, scoped, tag = 'scratch operand']
  %s0 = inlined_call_operand.hbm [shape: f32[2], index: 0, kind: input, shape index: {}]
  %s1 = inlined_call_operand.hbm [shape: f32[56,256], index: 1, kind: input, shape index: {}]
  %s2 = inlined_call_operand.hbm [shape: f32[8,128], index: 2, kind: output, shape index: {}]
  %s3 = sld [smem:[#allocation0]]
  $region34: #{tpu_custom_call.1} parent=0
    _
  %s5 = ssub.s32 1, %s3
  %s6 = scalar_select 0, %s5, %s3
  $region1: #{tpu_custom_call.1} parent=0
    #allocation6 [shape = 'u8[512]{0}', space=smem, size = 0x200, scoped, tag = 'input window, operand 0, single buffered']
    #allocation7 [shape = 's32[1]{0}', space=sflag, size = 0x4, scoped, tag = 'scoped memory for tpu_custom_call.1']
    #allocation8 [shape = 's32[1]{0}', space=sflag, size = 0x4, scoped, tag = 'scoped memory for tpu_custom_call.1']
    #allocation9 [shape = 's32[1]{0}', space=sflag, size = 0x4, scoped, tag = 'scoped memory for tpu_custom_call.1']
    #allocation10 [shape = 'u8[57344]{0}', space=vmem, size = 0xe000, scoped, tag = 'input window, operand 1, single buffered']
    #allocation11 [shape = 'u8[4096]{0}', space=vmem, size = 0x1000, scoped, tag = 'output window, operand 0, single buffered']
    %7 = vsyncpa [#allocation9], 0
    %8 = vsyncpa [#allocation7], 0
    %9 = vsyncpa [#allocation8], 0
    // Predicated region
    $region2: #{tpu_custom_call.1} parent=1 // pred_check
      _
    $region3: #{tpu_custom_call.1} parent=1 // pred_check_branch
      %11 = sbr.rel (0) target = $region5
    $region4: #{tpu_custom_call.1} parent=1 // pred_region
      %13 = vsyncadd [#allocation9], 0
      %s15 = sshll.u32 %s0, 4
      %s16 = int_to_ptr.hbm [resolvable:$true] %s15
      %18 = dma.hbm_to_smem %s16, 16, [#allocation6], [#allocation9]
    $region5: #{tpu_custom_call.1} parent=1 // pred_fallthru
      _
    // Predicated region
    $region6: #{tpu_custom_call.1} parent=1 // pred_check
      _
    $region7: #{tpu_custom_call.1} parent=1 // pred_check_branch
      %20 = sbr.rel (0) target = $region9
    $region8: #{tpu_custom_call.1} parent=1 // pred_region
      %22 = vsyncadd [#allocation7], 0
      %s23 = sshll.u32 %s1, 4
      %s24 = int_to_ptr.hbm [resolvable:$true] %s23
      %s25 = sshll.u32 [#allocation10], 4
      %s26 = int_to_ptr.vmem [resolvable:$true] %s25
      %31 = dma.hbm_to_vmem [thread:$0]  %s24, 1792, %s26, [#allocation7], 256, 256, 16
    $region9: #{tpu_custom_call.1} parent=1 // pred_fallthru
      _
    // Predicated region
    $region10: #{tpu_custom_call.1} parent=1 // pred_check
      _
    $region11: #{tpu_custom_call.1} parent=1 // pred_check_branch
      %33 = sbr.rel (0) target = $region13
    $region12: #{tpu_custom_call.1} parent=1 // pred_region
      %35 = dma.done [#allocation9], 16
    $region13: #{tpu_custom_call.1} parent=1 // pred_fallthru
      _
    // Predicated region
    $region14: #{tpu_custom_call.1} parent=1 // pred_check
      _
    $region15: #{tpu_custom_call.1} parent=1 // pred_check_branch
      %37 = sbr.rel (0) target = $region17
    $region16: #{tpu_custom_call.1} parent=1 // pred_region
      %39 = dma.done [#allocation7], 1792
    $region17: #{tpu_custom_call.1} parent=1 // pred_fallthru
      _
    %40 = sfence
    %p41 = scmp.eq.s32.totalorder 0, 0
    // Predicated region
    $region18: #{tpu_custom_call.1} parent=1 // pred_check
      %p42 = pneg %p41
    $region19: #{tpu_custom_call.1} parent=1 // pred_check_branch
      %44 = sbr.rel (%p42) target = $region21
    $region20: #{tpu_custom_call.1} parent=1 // pred_region
      %45 = vst [vmem:[#allocation2] sm:$0xff] 0.0
      %46 = vst [vmem:[#allocation2 + $0x8] sm:$0xff] 0.0
      %47 = vst [vmem:[#allocation2 + $0x10] sm:$0xff] 0.0
      %48 = vst [vmem:[#allocation2 + $0x18] sm:$0xff] 0.0
      %49 = vst [vmem:[#allocation2 + $0x20] sm:$0xf] 0.0
      %50 = vst [vmem:[#allocation2 + $0x28] sm:$0xf] 0.0
      %51 = vst [vmem:[#allocation3] sm:$0xf] 0.0
      %v52 = vlaneseq
      %vm53 = vcmp.ge.s32.totalorder %v52, 0
      %vm54 = vcmp.lt.s32.totalorder %v52, 256
      %vm55 = vmand %vm53, %vm54
      %56 = vst.msk [vmem:[#allocation4] sm:$0x3] %vm55, 0.0
      %57 = vst.msk [vmem:[#allocation5] sm:$0x3] %vm55, 0.0
    $region21: #{tpu_custom_call.1} parent=1 // pred_fallthru
      _
    %s58 = sld [smem:[#allocation6]]
    %v59 = vstv %s58
    %vm60 = vcmp.gt.f32.partialorder %v59, 0.5
    %s61 = sld [smem:[#allocation6 + $0x1]]
    %v62 = vstv %s61
    %s63 = scalar_lea.vmem [#allocation10], 102
    %v64 = vld [vmem:[%s63] ss:$8 sm:$0x3]
    %vm65 = vcmp.gt.f32.partialorder %v64, 0.0
    %v66 = vld [vmem:[#allocation10 + $0x10] sm:$0xfc]
    %v67 = vld [vmem:[#allocation10 + $0x18] sm:$0xfc]
    %v68 = vld [vmem:[#allocation10 + $0x20] sm:$0xff]
    %v69 = vld [vmem:[#allocation10 + $0x28] sm:$0xff]
    %v70 = vld [vmem:[#allocation10 + $0x30] sm:$0x3f]
    %v71 = vld [vmem:[#allocation10 + $0x38] sm:$0x3f]
    %v72 = vld [vmem:[#allocation10 + $0x30] sm:$0xc0]
    %v73 = vld [vmem:[#allocation10 + $0x38] sm:$0xc0]
    %v74 = vld [vmem:[#allocation10 + $0x40] sm:$0xff]
    %v75 = vld [vmem:[#allocation10 + $0x48] sm:$0xff]
    %v76 = vld [vmem:[#allocation10 + $0x50] sm:$0xff]
    %v77 = vld [vmem:[#allocation10 + $0x58] sm:$0xff]
    %v78 = vld [vmem:[#allocation10 + $0x60] sm:$0x3]
    %v79 = vld [vmem:[#allocation10 + $0x68] sm:$0x3]
    %vm88 = vcmask 1043456
    %v89 = vrot.slane %v72, 4
    %v90 = vrot.slane %v74, 4
    %v91 = vsel %vm88, %v89, %v90
    %v92 = vrot.slane %v73, 4
    %v93 = vrot.slane %v75, 4
    %v94 = vsel %vm88, %v92, %v93
    %v95 = vrot.slane %v76, 4
    %v96 = vsel %vm88, %v90, %v95
    %v97 = vrot.slane %v77, 4
    %v98 = vsel %vm88, %v93, %v97
    %v99 = vrot.slane %v78, 4
    %v100 = vsel %vm88, %v95, %v99
    %v101 = vrot.slane %v79, 4
    %v102 = vsel %vm88, %v97, %v101
    %v109 = vsub.f32 %v66, %v91
    %v110 = vsub.f32 %v67, %v94
    %v111 = vsub.f32 %v68, %v96
    %v112 = vsub.f32 %v69, %v98
    %v113 = vsub.f32 %v70, %v100
    %v114 = vsub.f32 %v71, %v102
    %v115 = vmul.f32 %v109, %v109
    %v116 = vmul.f32 %v110, %v110
    %v117 = vmul.f32 %v111, %v111
    %v118 = vmul.f32 %v112, %v112
    %v119 = vmul.f32 %v113, %v113
    %v120 = vmul.f32 %v114, %v114
    %v121 = vadd.f32 %v115, 0.0
    %v122 = vadd.f32 %v116, 0.0
    %v123 = vadd.f32 %v117, 0.0
    %v124 = vadd.f32 %v118, 0.0
    %v125 = vadd.f32 %v119, 0.0
    %v126 = vadd.f32 %v120, 0.0
    %s127 = scalar_lea.vmem [#allocation10], 4
    %v128 = vld [vmem:[%s127] ss:$8 sm:$0x3]
    %v129 = vmul.f32 %v128, %v128
    %v130 = vsel %vm65, 0.0, %v129
    %v131 = vadd.f32 %v130, 0.0
    %v132 = vld [vmem:[#allocation10] sm:$0x1f]
    %v133 = vld [vmem:[#allocation10 + $0x8] sm:$0x1f]
    %v134 = vld [vmem:[#allocation10] sm:$0xe0]
    %v135 = vld [vmem:[#allocation10 + $0x8] sm:$0xe0]
    %v136 = vld [vmem:[#allocation10 + $0x10] sm:$0x3]
    %v137 = vld [vmem:[#allocation10 + $0x18] sm:$0x3]
    %v138 = vsel %vm60, 1, 0
    %vm139 = vcmp.eq.s32.totalorder %v138, 1
    %vm144 = vcmask 1042432
    %v145 = vrot.slane %v134, 5
    %v146 = vrot.slane %v136, 5
    %v147 = vsel %vm144, %v145, %v146
    %v148 = vrot.slane %v135, 5
    %v149 = vrot.slane %v137, 5
    %v150 = vsel %vm144, %v148, %v149
    %v153 = vsel %vm139, %v132, %v147
    %v154 = vsel %vm139, %v133, %v150
    %v155 = vld [vmem:[#allocation10 + $0x60] sm:$0xc]
    %v156 = vld [vmem:[#allocation10 + $0x68] sm:$0xc]
    %v159 = vrot.slane %v155, 2
    %v160 = vrot.slane %v156, 2
    %v163 = vsub.f32 %v153, %v159
    %v164 = vsub.f32 %v154, %v160
    %v165 = vsel %vm65, 1, 0
    %v166 = vperm.slane %v165, 0
    %v167 = vperm.slane %v165, 1
    %vm168 = vcmp.eq.s32.totalorder %v166, 1
    %vm169 = vcmp.eq.s32.totalorder %v167, 1
    %v170 = vsel %vm168, %v153, 0.0
    %v171 = vsel %vm169, %v154, 0.0
    %v172 = vrsqrt.pop %v170
    %v173 = vmul.f32 %v172, %v170
    %v174 = vmul.f32 %v173, %v172
    %v175 = vmul.f32 0.5, %v174
    %v176 = vsub.f32 1.5, %v175
    %v177 = vmul.f32 %v172, %v176
    %v178 = vmul.f32 %v170, %v177
    %vm179 = vcmp.eq.f32.partialorder %v170, inf
    %v180 = vsel %vm179, %v170, %v178
    %vm181 = vcmp.eq.f32.partialorder %v170, 0.0
    %v182 = vand.u32 %v170, 2147483648
    %v183 = vsel %vm181, %v182, %v180
    %v184 = vrsqrt.pop %v171
    %v185 = vmul.f32 %v184, %v171
    %v186 = vmul.f32 %v185, %v184
    %v187 = vmul.f32 0.5, %v186
    %v188 = vsub.f32 1.5, %v187
    %v189 = vmul.f32 %v184, %v188
    %v190 = vmul.f32 %v171, %v189
    %vm191 = vcmp.eq.f32.partialorder %v171, inf
    %v192 = vsel %vm191, %v171, %v190
    %vm193 = vcmp.eq.f32.partialorder %v171, 0.0
    %v194 = vand.u32 %v171, 2147483648
    %v195 = vsel %vm193, %v194, %v192
    %v196 = vld [vmem:[#allocation10 + $0x60] sm:$0x30]
    %v197 = vld [vmem:[#allocation10 + $0x68] sm:$0x30]
    %v198 = vsel %vm168, %v196, 0.0
    %v199 = vsel %vm169, %v197, 0.0
    %v200 = vrsqrt.pop %v198
    %v201 = vmul.f32 %v200, %v198
    %v202 = vmul.f32 %v201, %v200
    %v203 = vmul.f32 0.5, %v202
    %v204 = vsub.f32 1.5, %v203
    %v205 = vmul.f32 %v200, %v204
    %v206 = vmul.f32 %v198, %v205
    %vm207 = vcmp.eq.f32.partialorder %v198, inf
    %v208 = vsel %vm207, %v198, %v206
    %vm209 = vcmp.eq.f32.partialorder %v198, 0.0
    %v210 = vand.u32 %v198, 2147483648
    %v211 = vsel %vm209, %v210, %v208
    %v212 = vrsqrt.pop %v199
    %v213 = vmul.f32 %v212, %v199
    %v214 = vmul.f32 %v213, %v212
    %v215 = vmul.f32 0.5, %v214
    %v216 = vsub.f32 1.5, %v215
    %v217 = vmul.f32 %v212, %v216
    %v218 = vmul.f32 %v199, %v217
    %vm219 = vcmp.eq.f32.partialorder %v199, inf
    %v220 = vsel %vm219, %v199, %v218
    %vm221 = vcmp.eq.f32.partialorder %v199, 0.0
    %v222 = vand.u32 %v199, 2147483648
    %v223 = vsel %vm221, %v222, %v220
    %v226 = vrot.slane %v211, 2
    %v227 = vrot.slane %v223, 2
    %v230 = vsub.f32 %v183, %v226
    %v231 = vsub.f32 %v195, %v227
    %v232 = vmul.f32 %v163, %v163
    %v233 = vmul.f32 %v164, %v164
    %v234 = vmul.f32 %v230, %v230
    %v235 = vmul.f32 %v231, %v231
    %v238 = vrot.slane %v234, 2
    %v239 = vrot.slane %v235, 2
    %v242 = vadd.f32 %v232, %v238
    %v243 = vadd.f32 %v233, %v239
    %v244 = vsel %vm168, %v242, 0.0
    %v245 = vsel %vm169, %v243, 0.0
    %v246 = vadd.f32 %v244, 0.0
    %v247 = vadd.f32 %v245, 0.0
    %v248 = vsub.f32 %v153, %v62
    %v249 = vsub.f32 %v154, %v62
    %v250 = vmul.f32 %v248, %v248
    %v251 = vmul.f32 %v249, %v249
    %254 = vst [vmem:[#allocation1] sm:$0xff] %v250
    %255 = vst [vmem:[#allocation1 + $0x9] sm:$0xff] %v251
    %s256 = scalar_lea.vmem [#allocation1], 4
    %v257 = vld [vmem:[%s256] ss:$9 sm:$0xff]
    %v259 = vsel %vm65, %v257, 0.0
    %v260 = vadd.f32 %v259, 0.0
    %v261 = vld [vmem:[#allocation2] sm:$0xff]
    %v262 = vld [vmem:[#allocation2 + $0x8] sm:$0xff]
    %v263 = vld [vmem:[#allocation2 + $0x10] sm:$0xff]
    %v264 = vld [vmem:[#allocation2 + $0x18] sm:$0xff]
    %v265 = vld [vmem:[#allocation2 + $0x20] sm:$0xf]
    %v266 = vld [vmem:[#allocation2 + $0x28] sm:$0xf]
    %vm273 = vcmask 1045504
    %v274 = vrot.slane %v121, 2
    %v275 = vrot.slane %v123, 2
    %v276 = vsel %vm273, %v274, %v275
    %v277 = vrot.slane %v122, 2
    %v278 = vrot.slane %v124, 2
    %v279 = vsel %vm273, %v277, %v278
    %v280 = vrot.slane %v125, 2
    %v281 = vsel %vm273, %v275, %v280
    %v282 = vrot.slane %v126, 2
    %v283 = vsel %vm273, %v278, %v282
    %v290 = vadd.f32 %v261, %v276
    %v291 = vadd.f32 %v262, %v279
    %v292 = vadd.f32 %v263, %v281
    %v293 = vadd.f32 %v264, %v283
    %v294 = vadd.f32 %v265, %v280
    %v295 = vadd.f32 %v266, %v282
    %296 = vst [vmem:[#allocation2] sm:$0xff] %v290
    %297 = vst [vmem:[#allocation2 + $0x8] sm:$0xff] %v291
    %298 = vst [vmem:[#allocation2 + $0x10] sm:$0xff] %v292
    %299 = vst [vmem:[#allocation2 + $0x18] sm:$0xff] %v293
    %300 = vst [vmem:[#allocation2 + $0x20] sm:$0xf] %v294
    %301 = vst [vmem:[#allocation2 + $0x28] sm:$0xf] %v295
    %v302 = vld [vmem:[#allocation3] sm:$0xf]
    %v305 = vrot.slane %v247, 6
    %vm306 = vcmask 1041408
    %v307 = vsel %vm306, %v246, %v305
    %v309 = vadd.f32 %v302, %v307
    %310 = vst [vmem:[#allocation3] sm:$0xf] %v309
    %v311 = vld [vmem:[#allocation4] sm:$0x3]
    %v312 = vadd.f32 %v311, %v260
    %v313 = vlaneseq
    %vm314 = vcmp.ge.s32.totalorder %v313, 0
    %vm315 = vcmp.lt.s32.totalorder %v313, 256
    %vm316 = vmand %vm314, %vm315
    %317 = vst.msk [vmem:[#allocation4] sm:$0x3] %vm316, %v312
    %v318 = vld [vmem:[#allocation5] sm:$0x3]
    %v319 = vadd.f32 %v318, %v131
    %320 = vst.msk [vmem:[#allocation5] sm:$0x3] %vm316, %v319
    // Predicated region
    $region22: #{tpu_custom_call.1} parent=1 // pred_check
      %p321 = pneg %p41
    $region23: #{tpu_custom_call.1} parent=1 // pred_check_branch
      %323 = sbr.rel (%p321) target = $region25
    $region24: #{tpu_custom_call.1} parent=1 // pred_region
      %v324 = vld [vmem:[#allocation2] sm:$0xff]
      %v325 = vld [vmem:[#allocation2 + $0x8] sm:$0xff]
      %v326 = vld [vmem:[#allocation2 + $0x10] sm:$0xff]
      %v327 = vld [vmem:[#allocation2 + $0x18] sm:$0xff]
      %v328 = vld [vmem:[#allocation2 + $0x20] sm:$0xf]
      %v329 = vld [vmem:[#allocation2 + $0x28] sm:$0xf]
      %v330 = vadd.f32 %v324, %v325
      %v331 = vadd.f32 %v330, %v326
      %v332 = vadd.f32 %v331, %v327
      %v333 = vsel %vm88, %v328, 0.0
      %v334 = vadd.f32 %v332, %v333
      %v335 = vsel %vm88, %v329, 0.0
      %v336 = vadd.f32 %v334, %v335
      %337 = vadd.xlane.f32.xlu0 %v336
      %v338 = vpop.xlane.xlu0 %337
      %v339 = vrot.slane %v338, 4
      %v340 = vadd.f32 %v338, %v339
      %v341 = vrot.slane %v340, 2
      %v342 = vadd.f32 %v340, %v341
      %v343 = vrot.slane %v342, 1
      %v344 = vadd.f32 %v342, %v343
      %s345 = vtos %v344
      %v346 = vld [vmem:[#allocation3] sm:$0xf]
      %348 = vst [vmem:[#allocation1] ss:$4 sm:$0xff] %v346
      %v349 = vld.sshfl [vmem:[#allocation1] sm:$0xff pattern:$0x73625140]
      %v350 = vld.sshfl [vmem:[#allocation1 + $0x8] sm:$0xff pattern:$0x73625140]
      %v353 = vsel %vm306, %v349, 0.0
      %v354 = vsel %vm306, %v350, 0.0
      %v355 = vadd.f32 %v353, %v354
      %356 = vadd.xlane.f32.xlu0 %v355
      %v357 = vpop.xlane.xlu0 %356
      %v358 = vrot.slane %v357, 4
      %v359 = vadd.f32 %v357, %v358
      %v360 = vrot.slane %v359, 2
      %v361 = vadd.f32 %v359, %v360
      %v362 = vrot.slane %v361, 1
      %v363 = vadd.f32 %v361, %v362
      %s364 = vtos %v363
      %s365 = smul.f32 %s364, 5.0
      %v366 = vld [vmem:[#allocation4] sm:$0x3]
      %v368 = vperm.slane %v366, 0
      %v369 = vperm.slane %v366, 1
      %vm372 = vcmask 1040384
      %v373 = vsel %vm372, %v368, 0.0
      %v374 = vsel %vm372, %v369, 0.0
      %v375 = vadd.f32 %v373, %v374
      %376 = vadd.xlane.f32.xlu0 %v375
      %v377 = vpop.xlane.xlu0 %376
      %v378 = vrot.slane %v377, 4
      %v379 = vadd.f32 %v377, %v378
      %v380 = vrot.slane %v379, 2
      %v381 = vadd.f32 %v379, %v380
      %v382 = vrot.slane %v381, 1
      %v383 = vadd.f32 %v381, %v382
      %s384 = vtos %v383
      %v385 = vld [vmem:[#allocation5] sm:$0x3]
      %v387 = vperm.slane %v385, 0
      %v388 = vperm.slane %v385, 1
      %v391 = vsel %vm372, %v387, 0.0
      %v392 = vsel %vm372, %v388, 0.0
      %v393 = vadd.f32 %v391, %v392
      %394 = vadd.xlane.f32.xlu0 %v393
      %v395 = vpop.xlane.xlu0 %394
      %v396 = vrot.slane %v395, 4
      %v397 = vadd.f32 %v395, %v396
      %v398 = vrot.slane %v397, 2
      %v399 = vadd.f32 %v397, %v398
      %v400 = vrot.slane %v399, 1
      %v401 = vadd.f32 %v399, %v400
      %s402 = vtos %v401
      %s403 = sadd.f32 %s345, %s402
      %s404 = sadd.f32 %s403, %s365
      %s405 = sadd.f32 %s404, %s384
      %v406 = vlaneseq
      %v407 = vand.u32 %v406, 127
      %vm408 = vcmp.eq.s32.totalorder %v407, 0
      %v409 = vstv %s405
      %v410 = vsel %vm408, %v409, 0.0
      %vm411 = vcmp.eq.s32.totalorder %v407, 1
      %v412 = vstv %s365
      %v413 = vsel %vm411, %v412, 0.0
      %v414 = vadd.f32 %v410, %v413
      %vm415 = vcmp.eq.s32.totalorder %v407, 2
      %v416 = vstv %s384
      %v417 = vsel %vm415, %v416, 0.0
      %v418 = vadd.f32 %v414, %v417
      %vm419 = vcmp.eq.s32.totalorder %v407, 3
      %v420 = vstv %s402
      %v421 = vsel %vm419, %v420, 0.0
      %v422 = vadd.f32 %v418, %v421
      %vm423 = vcmp.eq.s32.totalorder %v407, 4
      %v424 = vstv %s345
      %v425 = vsel %vm423, %v424, 0.0
      %v426 = vadd.f32 %v422, %v425
      %427 = vst [vmem:[#allocation11] sm:$0xff] %v426
    $region25: #{tpu_custom_call.1} parent=1 // pred_fallthru
      _
    // Predicated region
    $region26: #{tpu_custom_call.1} parent=1 // pred_check
      _
    $region27: #{tpu_custom_call.1} parent=1 // pred_check_branch
      %429 = sbr.rel (0) target = $region29
    $region28: #{tpu_custom_call.1} parent=1 // pred_region
      %431 = vsyncadd [#allocation8], 0
      %s433 = sshll.u32 [#allocation11], 4
      %s434 = int_to_ptr.vmem [resolvable:$true] %s433
      %s435 = sshll.u32 %s2, 4
      %s436 = int_to_ptr.hbm [resolvable:$true] %s435
      %438 = dma.vmem_to_hbm [thread:$0]  %s434, 128, %s436, [#allocation8]
    $region29: #{tpu_custom_call.1} parent=1 // pred_fallthru
      _
    // Predicated region
    $region30: #{tpu_custom_call.1} parent=1 // pred_check
      _
    $region31: #{tpu_custom_call.1} parent=1 // pred_check_branch
      %440 = sbr.rel (0) target = $region33
    $region32: #{tpu_custom_call.1} parent=1 // pred_region
      %442 = dma.done [#allocation8], 128
    $region33: #{tpu_custom_call.1} parent=1 // pred_fallthru
      _
    %443 = vsyncpa [#allocation7], 1
    %444 = vsyncpa [#allocation8], 1
    %445 = vsyncpa [#allocation9], 1

</llo_original>
